<compile_context>
chip_gen: v6e
topology: v6e:2x2x1
jax: 0.10.0
libtpu: 0.0.40
codegen_flags: <defaults>
</compile_context>

<pallas_src>
import functools
import math

import jax
import jax.numpy as jnp
from jax import lax
from jax.experimental import pallas as pl
from jax.experimental.pallas import tpu as pltpu


def _round_up(x, m):
    return ((x + m - 1) // m) * m


def _adacos_fused_kernel(s_ref, lbl_ref, x_ref, w_ref,
                         logits_ref, bexp_ref, labcos_ref, *, n_valid):
    """One C tile: cosine logits + fused AdaCos statistics.

    s_ref      : (1, 1)   f32 SMEM   old scale s (only used inside exp)
    lbl_ref    : (B, 1)   i32 VMEM   labels (-1 for padded rows)
    x_ref      : (B, D)   matmul dtype, L2-normalized rows (resident block)
    w_ref      : (TN, D)  matmul dtype, raw weight rows (streamed, 1 HBM pass)
    logits_ref : (B, TN)  f32        normalize(x) @ normalize(W).T for this tile
    bexp_ref   : (1, B, 1) f32       sum_{j != label, j < C} exp(s * logits[., j])
    labcos_ref : (1, B, 1) f32       logits[b, label[b]] if label[b] in this tile
    """
    j = pl.program_id(0)
    f32 = jnp.float32

    # Normalize this weight tile in-kernel (f32 square-sum + eps clamp): the
    # wrapper never makes an extra HBM pass over (C, D) just for ||w||.  The
    # extra VPU work hides under the W-tile DMA of this HBM-bound kernel;
    # padded all-zero rows stay finite and still yield exactly-zero logits.
    w32 = w_ref[...].astype(f32)
    inv_wn = lax.rsqrt(jnp.maximum(jnp.sum(w32 * w32, axis=1, keepdims=True),
                                   1e-24))
    w_n = (w32 * inv_wn).astype(w_ref.dtype)

    # (B, D) @ (TN, D)^T on the MXU with f32 accumulation (x pre-normalized).
    logits = lax.dot_general(
        x_ref[...], w_n,
        dimension_numbers=(((1,), (1,)), ((), ())),
        preferred_element_type=f32)                               # (B, TN)
    logits_ref[...] = logits.astype(logits_ref.dtype)

    # Fused statistics on the tile already in VMEM (exp -> idle EUP, masks ->
    # idle VPU).  Per-tile partials keep the C grid axis fully "parallel".
    col = lax.broadcasted_iota(jnp.int32, logits.shape, 1) + j * logits.shape[1]
    valid = col < n_valid                                         # mask C padding
    is_label = col == lbl_ref[...]                                # (B, TN)
    s_old = s_ref[0, 0]
    bexp = jnp.sum(
        jnp.where(jnp.logical_and(valid, jnp.logical_not(is_label)),
                  jnp.exp(s_old * logits), 0.0),
        axis=1, keepdims=True)                                    # (B, 1)
    labcos = jnp.sum(jnp.where(jnp.logical_and(valid, is_label), logits, 0.0),
                     axis=1, keepdims=True)                       # (B, 1)
    bexp_ref[...] = bexp[None]
    labcos_ref[...] = labcos[None]


def adacos_forward(x, weight, label=None, s=None, *,
                   matmul_dtype=jnp.bfloat16, max_tile_n=2048,
                   vmem_budget_bytes=24 << 20):
    """AdaCos forward. Returns (output, s_new) to mirror the stateful module."""
    B, D = x.shape
    C, D2 = weight.shape
    assert D == D2
    if s is None:
        s = math.sqrt(2.0) * math.log(C - 1)

    f32 = jnp.float32
    mm_bytes = jnp.dtype(matmul_dtype).itemsize

    b_pad = _round_up(B, 8)            # keep (8, 128) output store tiles unmasked
    d_pad = _round_up(D, 128)          # K axis folded: whole D stays resident
    # TODO(synk): for extremely large D a K-tiled accumulator variant would be
    # needed; typical embedding dims fit the single resident K block easily.

    # ---- widest lane-dense C tile that fits the per-generation VMEM budget
    # (double-buffered W tile + double-buffered logits tile + resident x block).
    def _tile_bytes(tn):
        return (2 * tn * d_pad * mm_bytes        # W tile, double-buffered
                + 2 * b_pad * tn * 4             # logits out tile, double-buffered
                + 2 * b_pad * d_pad * mm_bytes   # x block (constant index_map)
                + 16 * b_pad)                    # tiny stats blocks
    tile_n = min(max_tile_n, _round_up(C, 128))
    while tile_n > 128 and _tile_bytes(tile_n) > vmem_budget_bytes:
        tile_n -= 128
    c_pad = _round_up(C, tile_n)
    n_tiles = c_pad // tile_n
    vmem_limit = int(min(48 << 20, max(32 << 20, 2 * _tile_bytes(tile_n))))

    # ---- x: fold 1/||x|| in here (already touching x for pad/cast), so the
    # kernel epilogue never needs a lane-sparse (B, 1) scale input.
    x32 = x.astype(f32)
    x_n = x32 * lax.rsqrt(jnp.maximum(jnp.sum(x32 * x32, axis=1, keepdims=True),
                                      1e-24))
    if (b_pad, d_pad) != (B, D):
        x_n = jnp.pad(x_n, ((0, b_pad - B), (0, d_pad - D)))
    x_mm = x_n.astype(matmul_dtype)

    # ---- W: at most ONE pad+cast pass (no f32 upcast, no norm pre-pass).
    w_mm = weight
    if (c_pad, d_pad) != (C, D):
        w_mm = jnp.pad(w_mm, ((0, c_pad - C), (0, d_pad - D)))
    if w_mm.dtype != matmul_dtype:
        w_mm = w_mm.astype(matmul_dtype)

    if label is None:
        lbl = jnp.full((b_pad, 1), -1, jnp.int32)        # matches no column
    else:
        lbl = jnp.pad(label.astype(jnp.int32), (0, b_pad - B),
                      constant_values=-1).reshape(b_pad, 1)
    s_old = jnp.asarray(s, f32).reshape(1, 1)

    logits_pad, bexp_part, labcos_part = pl.pallas_call(
        functools.partial(_adacos_fused_kernel, n_valid=C),
        out_shape=(
            jax.ShapeDtypeStruct((b_pad, c_pad), f32),
            jax.ShapeDtypeStruct((n_tiles, b_pad, 1), f32),
            jax.ShapeDtypeStruct((n_tiles, b_pad, 1), f32),
        ),
        grid=(n_tiles,),
        in_specs=[
            pl.BlockSpec(memory_space=pltpu.MemorySpace.SMEM),      # s_old
            pl.BlockSpec((b_pad, 1), lambda j: (0, 0)),             # labels
            pl.BlockSpec((b_pad, d_pad), lambda j: (0, 0)),         # x (resident)
            pl.BlockSpec((tile_n, d_pad), lambda j: (j, 0)),        # W (streamed)
        ],
        out_specs=(
            pl.BlockSpec((b_pad, tile_n), lambda j: (0, j)),        # logits
            pl.BlockSpec((1, b_pad, 1), lambda j: (j, 0, 0)),       # bexp partial
            pl.BlockSpec((1, b_pad, 1), lambda j: (j, 0, 0)),       # labcos partial
        ),
        compiler_params=pltpu.CompilerParams(
            dimension_semantics=("parallel",),       # megacore-shardable on v7x
            vmem_limit_bytes=vmem_limit),
    )(s_old, lbl, x_mm, w_mm)

    if label is None:
        return logits_pad[:B, :C], jnp.asarray(s, f32)

    # ---- tiny O(B) scalar update in plain JAX.
    # TODO(synk): torch.median (lower median of B values) + the scalar
    # log/cos/min update is too small to benefit from a Pallas kernel.
    b_avg = jnp.sum(bexp_part[:, :B, 0]) / B
    labcos = jnp.sum(labcos_part[:, :B, 0], axis=0)                # (B,)
    theta_lab = jnp.arccos(jnp.clip(labcos, -1.0 + 1e-7, 1.0 - 1e-7))
    theta_med = jnp.sort(theta_lab)[(B - 1) // 2]                  # torch lower median
    s_new = jnp.log(b_avg) / jnp.cos(jnp.minimum(jnp.float32(math.pi / 4),
                                                 theta_med))

    # Final scale in XLA: fuses with the (B, C) slice — no 3rd Pallas launch
    # and no second (B, c_pad) buffer.
    output = s_new * logits_pad[:B, :C]
    return output, s_new


def _adacos_reference(x, weight, label, s=None):
    """Pure-JAX mirror of the PyTorch AdaCos.forward (label path)."""
    B = x.shape[0]
    C = weight.shape[0]
    if s is None:
        s = math.sqrt(2.0) * math.log(C - 1)
    eps = 1e-12
    xn = x / jnp.maximum(jnp.linalg.norm(x, axis=1, keepdims=True), eps)
    wn = weight / jnp.maximum(jnp.linalg.norm(weight, axis=1, keepdims=True), eps)
    logits = jnp.dot(xn, wn.T, precision=jax.lax.Precision.HIGHEST)
    theta = jnp.arccos(jnp.clip(logits, -1.0 + 1e-7, 1.0 - 1e-7))
    one_hot = jax.nn.one_hot(label, C, dtype=jnp.float32)
    b_avg = jnp.sum(jnp.where(one_hot < 1, jnp.exp(s * logits), 0.0)) / B
    theta_lab = theta[jnp.arange(B), label]
    theta_med = jnp.sort(theta_lab)[(B - 1) // 2]                  # torch lower median
    s_new = jnp.log(b_avg) / jnp.cos(jnp.minimum(jnp.float32(math.pi / 4), theta_med))
    return s_new * logits, s_new, logits


if __name__ == "__main__":
    B, in_features, out_features = 8, 32, 16

    key = jax.random.PRNGKey(0)
    kx, kw, kl = jax.random.split(key, 3)

    x = jax.random.normal(kx, (B, in_features), dtype=jnp.float32)
    limit = math.sqrt(6.0 / (in_features + out_features))          # xavier_uniform_
    weight = jax.random.uniform(kw, (out_features, in_features),
                                minval=-limit, maxval=limit, dtype=jnp.float32)
    label = jax.random.randint(kl, (B,), 0, out_features, dtype=jnp.int32)

    ref_out, ref_s, ref_logits = _adacos_reference(x, weight, label)

    # f32 MXU path: tight check against the pure-JAX reference.
    out_f32, _ = adacos_forward(x, weight, label, matmul_dtype=jnp.float32)
    out_f32 = jax.block_until_ready(out_f32)
    assert out_f32.shape == (B, out_features)
    assert jnp.allclose(out_f32, ref_out, atol=1e-3, rtol=1e-3), (
        f"f32 max abs err = {jnp.max(jnp.abs(out_f32 - ref_out))}")

    # label=None path returns the raw cosine logits.
    logits_only, _ = adacos_forward(x, weight, None, matmul_dtype=jnp.float32)
    logits_only = jax.block_until_ready(logits_only)
    assert jnp.allclose(logits_only, ref_logits, atol=1e-3, rtol=1e-3)

    # bf16 MXU fast path (default): loose smoke check (bf16 inputs + in-kernel
    # bf16-derived norms, f32 accumulation).
    out_bf16, _ = adacos_forward(x, weight, label)
    out_bf16 = jax.block_until_ready(out_bf16)
    assert jnp.max(jnp.abs(out_bf16 - ref_out)) < 2e-1, (
        f"bf16 max abs err = {jnp.max(jnp.abs(out_bf16 - ref_out))}")

    print("KERNEL_OK")
</pallas_src>

<mosaic_0001>
module attributes {stable_mosaic.version = 11 : i64} {
  func.func @_adacos_fused_kernel(%arg0: i32, %arg1: memref<1x1xf32, #tpu.memory_space<smem>>, %arg2: memref<8x1xi32, #tpu.memory_space<vmem>>, %arg3: memref<8x128xf32, #tpu.memory_space<vmem>>, %arg4: memref<128x128xf32, #tpu.memory_space<vmem>>, %arg5: memref<8x128xf32, #tpu.memory_space<vmem>>, %arg6: memref<1x8x1xf32, #tpu.memory_space<vmem>>, %arg7: memref<1x8x1xf32, #tpu.memory_space<vmem>>) attributes {dimension_semantics = [#tpu.dimension_semantics<parallel>], iteration_bounds = array<i64: 1>, scalar_prefetch = 0 : i64, scratch_operands = 0 : i64, tpu.core_type = #tpu.core_type<tc>, window_params = [{transform_indices = @transform_0, window_bounds = array<i64: 1, 1>}, {pipeline_mode = #tpu.pipeline_mode<synchronous>, transform_indices = @transform_1, window_bounds = array<i64: 8, 1>}, {pipeline_mode = #tpu.pipeline_mode<synchronous>, transform_indices = @transform_2, window_bounds = array<i64: 8, 128>}, {transform_indices = @transform_3, window_bounds = array<i64: 128, 128>}, {transform_indices = @transform_4, window_bounds = array<i64: 8, 128>}, {transform_indices = @transform_5, window_bounds = array<i64: 1, 8, 1>}, {transform_indices = @transform_6, window_bounds = array<i64: 1, 8, 1>}]} {
    %c0 = arith.constant 0 : index
    %c0_0 = arith.constant 0 : index
    %0 = vector.load %arg4[%c0, %c0_0] : memref<128x128xf32, #tpu.memory_space<vmem>>, vector<128x128xf32>
    %1 = arith.mulf %0, %0 : vector<128x128xf32>
    %cst = arith.constant dense<0.000000e+00> : vector<128xf32>
    %2 = vector.multi_reduction <add>, %1, %cst [1] : vector<128x128xf32> to vector<128xf32>
    %3 = vector.shape_cast %2 : vector<128xf32> to vector<128x1xf32>
    %cst_1 = arith.constant 1.000000e-24 : f32
    %4 = vector.broadcast %cst_1 : f32 to vector<128x1xf32>
    %5 = arith.maximumf %3, %4 : vector<128x1xf32>
    %6 = math.rsqrt %5 : vector<128x1xf32>
    %7 = vector.broadcast %6 : vector<128x1xf32> to vector<128x128xf32>
    %8 = arith.mulf %0, %7 : vector<128x128xf32>
    %c0_2 = arith.constant 0 : index
    %c0_3 = arith.constant 0 : index
    %9 = vector.load %arg3[%c0_2, %c0_3] : memref<8x128xf32, #tpu.memory_space<vmem>>, vector<8x128xf32>
    %cst_4 = arith.constant dense<0.000000e+00> : vector<8x128xf32>
    %10 = tpu.matmul %9, %8, %cst_4 {dimension_numbers = #tpu.dot_dimension_numbers<[1], [1], [0], [0], [0, 0, 1, 0], [], []>} : vector<8x128xf32>, vector<128x128xf32>, vector<8x128xf32> -> vector<8x128xf32>
    %c0_5 = arith.constant 0 : index
    %c0_6 = arith.constant 0 : index
    %11 = vector.load %arg5[%c0_5, %c0_6] : memref<8x128xf32, #tpu.memory_space<vmem>>, vector<8x128xf32>
    tpu.vector_store %arg5[%c0_5, %c0_6], %10 {strides = array<i32>} : memref<8x128xf32, #tpu.memory_space<vmem>>, vector<8x128xf32>,
    %12 = tpu.iota {dimensions = array<i32: 1>} : vector<8x128xi32>
    %c128_i32 = arith.constant 128 : i32
    %13 = arith.muli %arg0, %c128_i32 : i32
    %14 = vector.broadcast %13 : i32 to vector<8x128xi32>
    %15 = arith.addi %12, %14 : vector<8x128xi32>
    %c16_i32 = arith.constant 16 : i32
    %16 = vector.broadcast %c16_i32 : i32 to vector<8x128xi32>
    %17 = arith.cmpi slt, %15, %16 : vector<8x128xi32>
    %c0_7 = arith.constant 0 : index
    %c0_8 = arith.constant 0 : index
    %18 = vector.load %arg2[%c0_7, %c0_8] : memref<8x1xi32, #tpu.memory_space<vmem>>, vector<8x1xi32>
    %19 = vector.broadcast %18 : vector<8x1xi32> to vector<8x128xi32>
    %20 = arith.cmpi eq, %15, %19 : vector<8x128xi32>
    %c0_9 = arith.constant 0 : index
    %c0_10 = arith.constant 0 : index
    %21 = memref.load %arg1[%c0_9, %c0_10] : memref<1x1xf32, #tpu.memory_space<smem>>
    %cst_11 = arith.constant dense<true> : vector<8x128xi1>
    %22 = arith.xori %20, %cst_11 : vector<8x128xi1>
    %23 = arith.andi %17, %22 : vector<8x128xi1>
    %24 = vector.broadcast %21 : f32 to vector<8x128xf32>
    %25 = arith.mulf %24, %10 : vector<8x128xf32>
    %26 = math.exp %25 : vector<8x128xf32>
    %cst_12 = arith.constant 0.000000e+00 : f32
    %27 = vector.broadcast %cst_12 : f32 to vector<8x128xf32>
    %28 = arith.select %23, %26, %27 : vector<8x128xi1>, vector<8x128xf32>
    %cst_13 = arith.constant dense<0.000000e+00> : vector<8xf32>
    %29 = vector.multi_reduction <add>, %28, %cst_13 [1] : vector<8x128xf32> to vector<8xf32>
    %30 = vector.shape_cast %29 : vector<8xf32> to vector<8x1xf32>
    %31 = arith.andi %17, %20 : vector<8x128xi1>
    %cst_14 = arith.constant 0.000000e+00 : f32
    %32 = vector.broadcast %cst_14 : f32 to vector<8x128xf32>
    %33 = arith.select %31, %10, %32 : vector<8x128xi1>, vector<8x128xf32>
    %cst_15 = arith.constant dense<0.000000e+00> : vector<8xf32>
    %34 = vector.multi_reduction <add>, %33, %cst_15 [1] : vector<8x128xf32> to vector<8xf32>
    %35 = vector.shape_cast %34 : vector<8xf32> to vector<8x1xf32>
    %36 = vector.shape_cast %30 : vector<8x1xf32> to vector<1x8x1xf32>
    %c0_16 = arith.constant 0 : index
    %c0_17 = arith.constant 0 : index
    %c0_18 = arith.constant 0 : index
    %37 = vector.load %arg6[%c0_16, %c0_17, %c0_18] : memref<1x8x1xf32, #tpu.memory_space<vmem>>, vector<1x8x1xf32>
    tpu.vector_store %arg6[%c0_16, %c0_17, %c0_18], %36 {strides = array<i32>} : memref<1x8x1xf32, #tpu.memory_space<vmem>>, vector<1x8x1xf32>,
    %38 = vector.shape_cast %35 : vector<8x1xf32> to vector<1x8x1xf32>
    %c0_19 = arith.constant 0 : index
    %c0_20 = arith.constant 0 : index
    %c0_21 = arith.constant 0 : index
    %39 = vector.load %arg7[%c0_19, %c0_20, %c0_21] : memref<1x8x1xf32, #tpu.memory_space<vmem>>, vector<1x8x1xf32>
    tpu.vector_store %arg7[%c0_19, %c0_20, %c0_21], %38 {strides = array<i32>} : memref<1x8x1xf32, #tpu.memory_space<vmem>>, vector<1x8x1xf32>,
    return
  }
  func.func @transform_0(%arg0: i32) -> (i32, i32) {
    %c0_i32 = arith.constant 0 : i32
    %c0_i32_0 = arith.constant 0 : i32
    %c0_i32_1 = arith.constant 0 : i32
    return %c0_i32, %c0_i32_0 : i32, i32
  }
  func.func @transform_1(%arg0: i32) -> (i32, i32) {
    %c0_i32 = arith.constant 0 : i32
    %c0_i32_0 = arith.constant 0 : i32
    %c0_i32_1 = arith.constant 0 : i32
    return %c0_i32, %c0_i32_0 : i32, i32
  }
  func.func @transform_2(%arg0: i32) -> (i32, i32) {
    %c0_i32 = arith.constant 0 : i32
    %c0_i32_0 = arith.constant 0 : i32
    %c0_i32_1 = arith.constant 0 : i32
    return %c0_i32, %c0_i32_0 : i32, i32
  }
  func.func @transform_3(%arg0: i32) -> (i32, i32) {
    %c0_i32 = arith.constant 0 : i32
    %c0_i32_0 = arith.constant 0 : i32
    return %arg0, %c0_i32 : i32, i32
  }
  func.func @transform_4(%arg0: i32) -> (i32, i32) {
    %c0_i32 = arith.constant 0 : i32
    %c0_i32_0 = arith.constant 0 : i32
    return %c0_i32, %arg0 : i32, i32
  }
  func.func @transform_5(%arg0: i32) -> (i32, i32, i32) {
    %c0_i32 = arith.constant 0 : i32
    %c0_i32_0 = arith.constant 0 : i32
    %c0_i32_1 = arith.constant 0 : i32
    return %arg0, %c0_i32, %c0_i32_0 : i32, i32, i32
  }
  func.func @transform_6(%arg0: i32) -> (i32, i32, i32) {
    %c0_i32 = arith.constant 0 : i32
    %c0_i32_0 = arith.constant 0 : i32
    %c0_i32_1 = arith.constant 0 : i32
    return %arg0, %c0_i32, %c0_i32_0 : i32, i32, i32
  }
}

</mosaic_0001>

<llo_original>
// kernel: tpu_custom_call.1
$region0: #{tpu_custom_call.1}
  #allocation0 [shape = 'u32[]', space=smem, size = 0x4, offset = 0x4, fixed_abs, tag = 'smem constant byte address 0x4 - core index']
  #allocation1 [shape = 'u32[144,128]{1,0:T(1,128)}', space=vmem, size = 0x12000, scoped, tag = 'internal scratch']
  #allocation2 [shape = 'f32[1,1]{1,0:T(1,128)S(6)}', space=smem, size = 0x200, scoped, tag = 'scoped memory for tpu_custom_call.1']
  %s0 = inlined_call_operand.<no memory space> [shape: f32[1,1], index: 0, kind: input, shape index: {}]
  %s1 = inlined_call_operand.vmem [shape: s32[8,1], index: 1, kind: input, shape index: {}]
  %s2 = inlined_call_operand.vmem [shape: f32[8,128], index: 2, kind: input, shape index: {}]
  %s3 = inlined_call_operand.hbm [shape: f32[128,128], index: 3, kind: input, shape index: {}]
  %s4 = inlined_call_operand.hbm [shape: f32[8,128], index: 4, kind: output, shape index: {0}]
  %s5 = inlined_call_operand.vmem [shape: f32[1,8,1], index: 5, kind: output, shape index: {1}]
  %s6 = inlined_call_operand.vmem [shape: f32[1,8,1], index: 6, kind: output, shape index: {2}]
  %7 = xla_tuple %s4, %s5, %s6
  %s8 = sld [smem:[#allocation0]]
  $region46: #{tpu_custom_call.1} parent=0
    _
  %s10 = ssub.s32 1, %s8
  %s11 = scalar_select 0, %s10, %s8
  %12 = sst [smem:[#allocation2]] %s0
  $region1: #{tpu_custom_call.1} parent=0
    #allocation3 [shape = 'u8[65536]{0}', space=vmem, size = 0x10000, scoped, tag = 'input window, operand 3, single buffered']
    #allocation4 [shape = 's32[1]{0}', space=sflag, size = 0x4, scoped, tag = 'scoped memory for tpu_custom_call.1']
    #allocation5 [shape = 's32[1]{0}', space=sflag, size = 0x4, scoped, tag = 'scoped memory for tpu_custom_call.1']
    #allocation6 [shape = 'u8[4096]{0}', space=vmem, size = 0x1000, scoped, tag = 'output window, operand 0, single buffered']
    %13 = vsyncpa [#allocation4], 0
    %14 = vsyncpa [#allocation5], 0
    // Predicated region
    $region2: #{tpu_custom_call.1} parent=1 // pred_check
      _
    $region3: #{tpu_custom_call.1} parent=1 // pred_check_branch
      %16 = sbr.rel (0) target = $region5
    $region4: #{tpu_custom_call.1} parent=1 // pred_region
      _
    $region5: #{tpu_custom_call.1} parent=1 // pred_fallthru
      _
    // Predicated region
    $region6: #{tpu_custom_call.1} parent=1 // pred_check
      _
    $region7: #{tpu_custom_call.1} parent=1 // pred_check_branch
      %18 = sbr.rel (0) target = $region9
    $region8: #{tpu_custom_call.1} parent=1 // pred_region
      _
    $region9: #{tpu_custom_call.1} parent=1 // pred_fallthru
      _
    // Predicated region
    $region10: #{tpu_custom_call.1} parent=1 // pred_check
      _
    $region11: #{tpu_custom_call.1} parent=1 // pred_check_branch
      %20 = sbr.rel (0) target = $region13
    $region12: #{tpu_custom_call.1} parent=1 // pred_region
      _
    $region13: #{tpu_custom_call.1} parent=1 // pred_fallthru
      _
    // Predicated region
    $region14: #{tpu_custom_call.1} parent=1 // pred_check
      _
    $region15: #{tpu_custom_call.1} parent=1 // pred_check_branch
      %22 = sbr.rel (0) target = $region17
    $region16: #{tpu_custom_call.1} parent=1 // pred_region
      %s24 = ssub.s32 2048, 2048
      %25 = vsyncadd [#allocation4], %s24
      %s26 = sshll.u32 [#allocation3], 4
      %s27 = int_to_ptr.vmem [resolvable:$true] %s26
      %32 = dma.hbm_to_vmem [thread:$0]  %s3, 2048, %s27, [#allocation4], 128, 128, 8
    $region17: #{tpu_custom_call.1} parent=1 // pred_fallthru
      _
    // Predicated region
    $region18: #{tpu_custom_call.1} parent=1 // pred_check
      _
    $region19: #{tpu_custom_call.1} parent=1 // pred_check_branch
      %34 = sbr.rel (0) target = $region21
    $region20: #{tpu_custom_call.1} parent=1 // pred_region
      %35 = dma.done [#allocation4], 2048
    $region21: #{tpu_custom_call.1} parent=1 // pred_fallthru
      _
    %v36 = vld [vmem:[#allocation3] sm:$0xff]
    %v37 = vld [vmem:[#allocation3 + $0x8] sm:$0xff]
    %v38 = vld [vmem:[#allocation3 + $0x10] sm:$0xff]
    %v39 = vld [vmem:[#allocation3 + $0x18] sm:$0xff]
    %v40 = vld [vmem:[#allocation3 + $0x20] sm:$0xff]
    %v41 = vld [vmem:[#allocation3 + $0x28] sm:$0xff]
    %v42 = vld [vmem:[#allocation3 + $0x30] sm:$0xff]
    %v43 = vld [vmem:[#allocation3 + $0x38] sm:$0xff]
    %v44 = vld [vmem:[#allocation3 + $0x40] sm:$0xff]
    %v45 = vld [vmem:[#allocation3 + $0x48] sm:$0xff]
    %v46 = vld [vmem:[#allocation3 + $0x50] sm:$0xff]
    %v47 = vld [vmem:[#allocation3 + $0x58] sm:$0xff]
    %v48 = vld [vmem:[#allocation3 + $0x60] sm:$0xff]
    %v49 = vld [vmem:[#allocation3 + $0x68] sm:$0xff]
    %v50 = vld [vmem:[#allocation3 + $0x70] sm:$0xff]
    %v51 = vld [vmem:[#allocation3 + $0x78] sm:$0xff]
    %v52 = vmul.f32 %v36, %v36
    %v53 = vmul.f32 %v37, %v37
    %v54 = vmul.f32 %v38, %v38
    %v55 = vmul.f32 %v39, %v39
    %v56 = vmul.f32 %v40, %v40
    %v57 = vmul.f32 %v41, %v41
    %v58 = vmul.f32 %v42, %v42
    %v59 = vmul.f32 %v43, %v43
    %v60 = vmul.f32 %v44, %v44
    %v61 = vmul.f32 %v45, %v45
    %v62 = vmul.f32 %v46, %v46
    %v63 = vmul.f32 %v47, %v47
    %v64 = vmul.f32 %v48, %v48
    %v65 = vmul.f32 %v49, %v49
    %v66 = vmul.f32 %v50, %v50
    %v67 = vmul.f32 %v51, %v51
    %68 = vadd.xlane.f32.xlu0 %v52
    %v69 = vpop.xlane.xlu0 %68
    %70 = vadd.xlane.f32.xlu0 %v53
    %v71 = vpop.xlane.xlu0 %70
    %72 = vadd.xlane.f32.xlu0 %v54
    %v73 = vpop.xlane.xlu0 %72
    %74 = vadd.xlane.f32.xlu0 %v55
    %v75 = vpop.xlane.xlu0 %74
    %76 = vadd.xlane.f32.xlu0 %v56
    %v77 = vpop.xlane.xlu0 %76
    %78 = vadd.xlane.f32.xlu0 %v57
    %v79 = vpop.xlane.xlu0 %78
    %80 = vadd.xlane.f32.xlu0 %v58
    %v81 = vpop.xlane.xlu0 %80
    %82 = vadd.xlane.f32.xlu0 %v59
    %v83 = vpop.xlane.xlu0 %82
    %84 = vadd.xlane.f32.xlu0 %v60
    %v85 = vpop.xlane.xlu0 %84
    %86 = vadd.xlane.f32.xlu0 %v61
    %v87 = vpop.xlane.xlu0 %86
    %88 = vadd.xlane.f32.xlu0 %v62
    %v89 = vpop.xlane.xlu0 %88
    %90 = vadd.xlane.f32.xlu0 %v63
    %v91 = vpop.xlane.xlu0 %90
    %92 = vadd.xlane.f32.xlu0 %v64
    %v93 = vpop.xlane.xlu0 %92
    %94 = vadd.xlane.f32.xlu0 %v65
    %v95 = vpop.xlane.xlu0 %94
    %96 = vadd.xlane.f32.xlu0 %v66
    %v97 = vpop.xlane.xlu0 %96
    %98 = vadd.xlane.f32.xlu0 %v67
    %v99 = vpop.xlane.xlu0 %98
    %v100 = vmax.f32 %v69, 1e-24
    %v101 = vmax.f32 %v71, 1e-24
    %v102 = vmax.f32 %v73, 1e-24
    %v103 = vmax.f32 %v75, 1e-24
    %v104 = vmax.f32 %v77, 1e-24
    %v105 = vmax.f32 %v79, 1e-24
    %v106 = vmax.f32 %v81, 1e-24
    %v107 = vmax.f32 %v83, 1e-24
    %v108 = vmax.f32 %v85, 1e-24
    %v109 = vmax.f32 %v87, 1e-24
    %v110 = vmax.f32 %v89, 1e-24
    %v111 = vmax.f32 %v91, 1e-24
    %v112 = vmax.f32 %v93, 1e-24
    %v113 = vmax.f32 %v95, 1e-24
    %v114 = vmax.f32 %v97, 1e-24
    %v115 = vmax.f32 %v99, 1e-24
    %v116 = vrsqrt.pop %v100
    %v117 = vrsqrt.pop %v101
    %v118 = vrsqrt.pop %v102
    %v119 = vrsqrt.pop %v103
    %v120 = vrsqrt.pop %v104
    %v121 = vrsqrt.pop %v105
    %v122 = vrsqrt.pop %v106
    %v123 = vrsqrt.pop %v107
    %v124 = vrsqrt.pop %v108
    %v125 = vrsqrt.pop %v109
    %v126 = vrsqrt.pop %v110
    %v127 = vrsqrt.pop %v111
    %v128 = vrsqrt.pop %v112
    %v129 = vrsqrt.pop %v113
    %v130 = vrsqrt.pop %v114
    %v131 = vrsqrt.pop %v115
    %v132 = vmul.f32 %v36, %v116
    %v133 = vmul.f32 %v37, %v117
    %v134 = vmul.f32 %v38, %v118
    %v135 = vmul.f32 %v39, %v119
    %v136 = vmul.f32 %v40, %v120
    %v137 = vmul.f32 %v41, %v121
    %v138 = vmul.f32 %v42, %v122
    %v139 = vmul.f32 %v43, %v123
    %v140 = vmul.f32 %v44, %v124
    %v141 = vmul.f32 %v45, %v125
    %v142 = vmul.f32 %v46, %v126
    %v143 = vmul.f32 %v47, %v127
    %v144 = vmul.f32 %v48, %v128
    %v145 = vmul.f32 %v49, %v129
    %v146 = vmul.f32 %v50, %v130
    %v147 = vmul.f32 %v51, %v131
    %v148 = vld [vmem:[%s2] sm:$0xff]
    %149 = vmatprep.subr.mxu0 0.0
    %150 = vmatpush1.xpose.msra.mxu0 %v147
    %151 = vmatprep.subr.mxu0 0.0
    %152 = vmatpush1.xpose.msra.mxu0 %v146
    %153 = vmatprep.subr.mxu0 0.0
    %154 = vmatpush1.xpose.msra.mxu0 %v145
    %155 = vmatprep.subr.mxu0 0.0
    %156 = vmatpush1.xpose.msra.mxu0 %v144
    %157 = vmatprep.subr.mxu0 0.0
    %158 = vmatpush1.xpose.msra.mxu0 %v143
    %159 = vmatprep.subr.mxu0 0.0
    %160 = vmatpush1.xpose.msra.mxu0 %v142
    %161 = vmatprep.subr.mxu0 0.0
    %162 = vmatpush1.xpose.msra.mxu0 %v141
    %163 = vmatprep.subr.mxu0 0.0
    %164 = vmatpush1.xpose.msra.mxu0 %v140
    %165 = vmatprep.subr.mxu0 0.0
    %166 = vmatpush1.xpose.msra.mxu0 %v139
    %167 = vmatprep.subr.mxu0 0.0
    %168 = vmatpush1.xpose.msra.mxu0 %v138
    %169 = vmatprep.subr.mxu0 0.0
    %170 = vmatpush1.xpose.msra.mxu0 %v137
    %171 = vmatprep.subr.mxu0 0.0
    %172 = vmatpush1.xpose.msra.mxu0 %v136
    %173 = vmatprep.subr.mxu0 0.0
    %174 = vmatpush1.xpose.msra.mxu0 %v135
    %175 = vmatprep.subr.mxu0 0.0
    %176 = vmatpush1.xpose.msra.mxu0 %v134
    %177 = vmatprep.subr.mxu0 0.0
    %178 = vmatpush1.xpose.msra.mxu0 %v133
    %179 = vmatprep.subr.mxu0 0.0
    %180 = vmatpush1.xpose.msra.mxu0 %v132
    %181 = vmatprep.subr.mxu0 0.0
    %182 = vmatpush2.xpose.msra.mxu0 0.0
    %183 = vmatprep.subr.mxu0 0.0
    %184 = vmatpush2.xpose.msra.mxu0 0.0
    %185 = vmatprep.subr.mxu0 0.0
    %186 = vmatpush2.xpose.msra.mxu0 0.0
    %187 = vmatprep.subr.mxu0 0.0
    %188 = vmatpush2.xpose.msra.mxu0 0.0
    %189 = vmatprep.subr.mxu0 0.0
    %190 = vmatpush2.xpose.msra.mxu0 0.0
    %191 = vmatprep.subr.mxu0 0.0
    %192 = vmatpush2.xpose.msra.mxu0 0.0
    %193 = vmatprep.subr.mxu0 0.0
    %194 = vmatpush2.xpose.msra.mxu0 0.0
    %195 = vmatprep.subr.mxu0 0.0
    %196 = vmatpush2.xpose.msra.mxu0 0.0
    %197 = vmatprep.subr.mxu0 0.0
    %198 = vmatpush2.xpose.msra.mxu0 0.0
    %199 = vmatprep.subr.mxu0 0.0
    %200 = vmatpush2.xpose.msra.mxu0 0.0
    %201 = vmatprep.subr.mxu0 0.0
    %202 = vmatpush2.xpose.msra.mxu0 0.0
    %203 = vmatprep.subr.mxu0 0.0
    %204 = vmatpush2.xpose.msra.mxu0 0.0
    %205 = vmatprep.subr.mxu0 0.0
    %206 = vmatpush2.xpose.msra.mxu0 0.0
    %207 = vmatprep.subr.mxu0 0.0
    %208 = vmatpush2.xpose.msra.mxu0 0.0
    %209 = vmatprep.subr.mxu0 0.0
    %210 = vmatpush2.xpose.msra.mxu0 0.0
    %211 = vmatprep.subr.mxu0 0.0
    %212 = vmatpush2.xpose.msra.mxu0 0.0
    %213 = vmatprep.mubr.f32.mxu0 0.0
    %214 = vmatmul.mubr.f32.gmra.mxu0 %v148
    %v215 = vpop.f32.mrf.mxu0
    %v216 = vadd.f32 0.0, %v215
    %v217 = vpop.f32.mrf.mxu0
    %218 = vdwg.mxu0
    %219 = vst [vmem:[#allocation6] sm:$0xff] %v216
    %v220 = vlaneseq
    %v221 = vand.u32 %v220, 127
    %s222 = smul.u32 0, 128
    %v223 = vstv %s222
    %v224 = vadd.s32 %v221, %v223
    %vm225 = vcmp.lt.s32.totalorder %v224, 16
    %v226 = vld [vmem:[%s1] sm:$0xff]
    %227 = vset.pattern.permute.xlu0 0
    %228 = vperm.xlu0 %227, %v226
    %v229 = vpop.permute.xlu0 %228
    %vm230 = vcmp.eq.s32.totalorder %v224, %v229
    %s231 = sld [smem:[#allocation2]]
    %vm232 = vmxor %vm230, 1
    %vm233 = vmand %vm225, %vm232
    %v234 = vstv %s231
    %v235 = vmul.f32 %v234, %v216
    %v236 = vmul.f32 %v235, 1.442695
    %v237 = vpow.pop %v236
    %v238 = vsel %vm233, %v237, 0.0
    %239 = vadd.xlane.f32.xlu0 %v238
    %v240 = vpop.xlane.xlu0 %239
    %vm241 = vmand %vm225, %vm230
    %v242 = vsel %vm241, %v216, 0.0
    %243 = vadd.xlane.f32.xlu0 %v242
    %v244 = vpop.xlane.xlu0 %243
    %vm245 = vcmask 7168
    %246 = vst.msk [vmem:[%s5] sm:$0xff] %vm245, %v240
    %247 = vst.msk [vmem:[%s6] sm:$0xff] %vm245, %v244
    // Predicated region
    $region22: #{tpu_custom_call.1} parent=1 // pred_check
      _
    $region23: #{tpu_custom_call.1} parent=1 // pred_check_branch
      %249 = sbr.rel (0) target = $region25
    $region24: #{tpu_custom_call.1} parent=1 // pred_region
      %s251 = ssub.s32 128, 128
      %252 = vsyncadd [#allocation5], %s251
      %s254 = sshll.u32 [#allocation6], 4
      %s255 = int_to_ptr.vmem [resolvable:$true] %s254
      %257 = dma.vmem_to_hbm [thread:$0]  %s255, 128, %s4, [#allocation5]
    $region25: #{tpu_custom_call.1} parent=1 // pred_fallthru
      _
    // Predicated region
    $region26: #{tpu_custom_call.1} parent=1 // pred_check
      _
    $region27: #{tpu_custom_call.1} parent=1 // pred_check_branch
      %259 = sbr.rel (0) target = $region29
    $region28: #{tpu_custom_call.1} parent=1 // pred_region
      _
    $region29: #{tpu_custom_call.1} parent=1 // pred_fallthru
      _
    // Predicated region
    $region30: #{tpu_custom_call.1} parent=1 // pred_check
      _
    $region31: #{tpu_custom_call.1} parent=1 // pred_check_branch
      %261 = sbr.rel (0) target = $region33
    $region32: #{tpu_custom_call.1} parent=1 // pred_region
      _
    $region33: #{tpu_custom_call.1} parent=1 // pred_fallthru
      _
    // Predicated region
    $region34: #{tpu_custom_call.1} parent=1 // pred_check
      _
    $region35: #{tpu_custom_call.1} parent=1 // pred_check_branch
      %263 = sbr.rel (0) target = $region37
    $region36: #{tpu_custom_call.1} parent=1 // pred_region
      %264 = dma.done [#allocation5], 128
    $region37: #{tpu_custom_call.1} parent=1 // pred_fallthru
      _
    // Predicated region
    $region38: #{tpu_custom_call.1} parent=1 // pred_check
      _
    $region39: #{tpu_custom_call.1} parent=1 // pred_check_branch
      %266 = sbr.rel (0) target = $region41
    $region40: #{tpu_custom_call.1} parent=1 // pred_region
      _
    $region41: #{tpu_custom_call.1} parent=1 // pred_fallthru
      _
    // Predicated region
    $region42: #{tpu_custom_call.1} parent=1 // pred_check
      _
    $region43: #{tpu_custom_call.1} parent=1 // pred_check_branch
      %268 = sbr.rel (0) target = $region45
    $region44: #{tpu_custom_call.1} parent=1 // pred_region
      _
    $region45: #{tpu_custom_call.1} parent=1 // pred_fallthru
      _
    %269 = vsyncpa [#allocation4], 1
    %270 = vsyncpa [#allocation5], 1

</llo_original>
